<compile_context>
chip_gen: v6e
topology: v6e:2x2x1
jax: 0.10.0
libtpu: 0.0.40
codegen_flags: <defaults>
</compile_context>

<pallas_src>
import jax
import jax.numpy as jnp
from jax.experimental import pallas as pl
from jax.experimental.pallas import tpu as pltpu


def popper_kernel(x_ref,
                  w1_ref, b1_ref,
                  w2_ref, b2_ref,
                  w3_ref, b3_ref,
                  w4_ref, b4_ref,
                  o_ref):
    # Whole hot path (4 matmuls + 3 tanh + bias adds) fused in one kernel body.
    # Matmul operands are bf16 (MXU-native on v5e/v6e/v7x), accumulation is f32
    # via preferred_element_type; tanh and bias adds run in f32.
    h = x_ref[...].astype(jnp.bfloat16)
    h = jnp.dot(h, w1_ref[...], preferred_element_type=jnp.float32) + b1_ref[...]
    h = jnp.tanh(h).astype(jnp.bfloat16)
    h = jnp.dot(h, w2_ref[...], preferred_element_type=jnp.float32) + b2_ref[...]
    h = jnp.tanh(h).astype(jnp.bfloat16)
    h = jnp.dot(h, w3_ref[...], preferred_element_type=jnp.float32) + b3_ref[...]
    h = jnp.tanh(h).astype(jnp.bfloat16)
    y = jnp.dot(h, w4_ref[...], preferred_element_type=jnp.float32) + b4_ref[...]
    o_ref[...] = y.astype(o_ref.dtype)


def popper_net_forward(x, params, *, tb_target=256):
    """x: [B, D_in] float32. params: dict of [in,out] weights and [1,out] biases."""
    B, D_in = x.shape
    H = params["w1"].shape[1]
    D_out = params["w4"].shape[1]

    # --- Lane-dense output: pad last layer to >=128 output lanes. ---
    n_pad = max(128, pl.cdiv(D_out, 128) * 128)
    w4 = jnp.zeros((H, n_pad), params["w4"].dtype).at[:, :D_out].set(params["w4"])
    b4 = jnp.zeros((1, n_pad), params["b4"].dtype).at[:, :D_out].set(params["b4"])

    # --- bf16 MXU operands (halves resident weight bytes); biases stay f32. ---
    w1 = params["w1"].astype(jnp.bfloat16)
    w2 = params["w2"].astype(jnp.bfloat16)
    w3 = params["w3"].astype(jnp.bfloat16)
    w4 = w4.astype(jnp.bfloat16)

    # --- Pad batch to a sublane multiple and pick a large aligned batch tile. ---
    b_pad = pl.cdiv(B, 8) * 8
    if b_pad != B:
        x = jnp.pad(x, ((0, b_pad - B), (0, 0)))
    tb = min(b_pad, tb_target)

    grid = (pl.cdiv(b_pad, tb),)
    full = lambda shape: pl.BlockSpec(shape, lambda i: (0, 0))

    out = pl.pallas_call(
        popper_kernel,
        out_shape=jax.ShapeDtypeStruct((b_pad, n_pad), jnp.float32),
        grid_spec=pltpu.PrefetchScalarGridSpec(
            num_scalar_prefetch=0,
            grid=grid,
            in_specs=[
                pl.BlockSpec((tb, D_in), lambda i: (i, 0)),
                full(w1.shape), full(params["b1"].shape),
                full(w2.shape), full(params["b2"].shape),
                full(w3.shape), full(params["b3"].shape),
                full(w4.shape), full(b4.shape),
            ],
            out_specs=pl.BlockSpec((tb, n_pad), lambda i: (i, 0)),
        ),
        compiler_params=pltpu.CompilerParams(
            dimension_semantics=("parallel",)),
    )(x,
      w1, params["b1"],
      w2, params["b2"],
      w3, params["b3"],
      w4, b4)

    return out[:B, :D_out]


def init_params(key, d_in, d_out, h=64):
    """Deterministic init mirroring nn.Linear's default U(-1/sqrt(fan_in), +...)."""
    dims = [(d_in, h), (h, h), (h, h), (h, d_out)]
    params = {}
    for idx, (fan_in, fan_out) in enumerate(dims, start=1):
        key, kw, kb = jax.random.split(key, 3)
        bound = 1.0 / jnp.sqrt(float(fan_in))
        # stored directly as [in, out] (transposed relative to PyTorch storage)
        params[f"w{idx}"] = jax.random.uniform(
            kw, (fan_in, fan_out), jnp.float32, -bound, bound)
        # biases kept 2-D [1, out] for clean TPU lane layout / broadcasting
        params[f"b{idx}"] = jax.random.uniform(
            kb, (1, fan_out), jnp.float32, -bound, bound)
    return params


def popper_net_ref(x, params):
    """Pure-JAX reference with the same bf16-operand / f32-accumulate recipe."""
    def lin(h, w, b):
        return jnp.dot(h.astype(jnp.bfloat16), w.astype(jnp.bfloat16),
                       preferred_element_type=jnp.float32) + b
    h = jnp.tanh(lin(x, params["w1"], params["b1"]))
    h = jnp.tanh(lin(h, params["w2"], params["b2"]))
    h = jnp.tanh(lin(h, params["w3"], params["b3"]))
    return lin(h, params["w4"], params["b4"])


if __name__ == "__main__":
    key = jax.random.PRNGKey(0)
    D_in, D_out = 4, 2
    kx, kp = jax.random.split(key)
    params = init_params(kp, D_in, D_out)

    # Case 1: tiny batch (original demo shape) -> single 8-row tile.
    x_small = jax.random.normal(kx, (8, D_in), jnp.float32)
    out_small = jax.block_until_ready(popper_net_forward(x_small, params))
    ref_small = popper_net_ref(x_small, params)
    assert out_small.shape == (8, D_out)
    assert jnp.allclose(out_small, ref_small, atol=1e-3, rtol=1e-3), \
        "mismatch vs reference (small batch)"

    # Case 2: larger batch -> 4 parallel grid steps of 256 rows each.
    x_big = jax.random.normal(kx, (1024, D_in), jnp.float32)
    out_big = jax.block_until_ready(popper_net_forward(x_big, params))
    ref_big = popper_net_ref(x_big, params)
    assert out_big.shape == (1024, D_out)
    assert jnp.allclose(out_big, ref_big, atol=1e-3, rtol=1e-3), \
        "mismatch vs reference (large batch)"

    print("KERNEL_OK")
</pallas_src>

<mosaic_0001>
module attributes {stable_mosaic.version = 11 : i64} {
  func.func @popper_kernel(%arg0: i32, %arg1: memref<8x4xf32, #tpu.memory_space<vmem>>, %arg2: memref<4x64xbf16, #tpu.memory_space<vmem>>, %arg3: memref<1x64xf32, #tpu.memory_space<vmem>>, %arg4: memref<64x64xbf16, #tpu.memory_space<vmem>>, %arg5: memref<1x64xf32, #tpu.memory_space<vmem>>, %arg6: memref<64x64xbf16, #tpu.memory_space<vmem>>, %arg7: memref<1x64xf32, #tpu.memory_space<vmem>>, %arg8: memref<64x128xbf16, #tpu.memory_space<vmem>>, %arg9: memref<1x128xf32, #tpu.memory_space<vmem>>, %arg10: memref<8x128xf32, #tpu.memory_space<vmem>>) attributes {dimension_semantics = [#tpu.dimension_semantics<parallel>], iteration_bounds = array<i64: 1>, scalar_prefetch = 0 : i64, scratch_operands = 0 : i64, tpu.core_type = #tpu.core_type<tc>, window_params = [{transform_indices = @transform_0, window_bounds = array<i64: 8, 4>}, {pipeline_mode = #tpu.pipeline_mode<synchronous>, transform_indices = @transform_1, window_bounds = array<i64: 4, 64>}, {pipeline_mode = #tpu.pipeline_mode<synchronous>, transform_indices = @transform_2, window_bounds = array<i64: 1, 64>}, {pipeline_mode = #tpu.pipeline_mode<synchronous>, transform_indices = @transform_3, window_bounds = array<i64: 64, 64>}, {pipeline_mode = #tpu.pipeline_mode<synchronous>, transform_indices = @transform_4, window_bounds = array<i64: 1, 64>}, {pipeline_mode = #tpu.pipeline_mode<synchronous>, transform_indices = @transform_5, window_bounds = array<i64: 64, 64>}, {pipeline_mode = #tpu.pipeline_mode<synchronous>, transform_indices = @transform_6, window_bounds = array<i64: 1, 64>}, {pipeline_mode = #tpu.pipeline_mode<synchronous>, transform_indices = @transform_7, window_bounds = array<i64: 64, 128>}, {pipeline_mode = #tpu.pipeline_mode<synchronous>, transform_indices = @transform_8, window_bounds = array<i64: 1, 128>}, {transform_indices = @transform_9, window_bounds = array<i64: 8, 128>}]} {
    %c0 = arith.constant 0 : index
    %c0_0 = arith.constant 0 : index
    %0 = vector.load %arg1[%c0, %c0_0] : memref<8x4xf32, #tpu.memory_space<vmem>>, vector<8x4xf32>
    %1 = arith.truncf %0 : vector<8x4xf32> to vector<8x4xbf16>
    %c0_1 = arith.constant 0 : index
    %c0_2 = arith.constant 0 : index
    %2 = vector.load %arg2[%c0_1, %c0_2] : memref<4x64xbf16, #tpu.memory_space<vmem>>, vector<4x64xbf16>
    %cst = arith.constant dense<0.000000e+00> : vector<8x64xf32>
    %3 = tpu.matmul %1, %2, %cst {dimension_numbers = #tpu.dot_dimension_numbers<[1], [0], [0], [1], [0, 0, 1, 1], [], []>} : vector<8x4xbf16>, vector<4x64xbf16>, vector<8x64xf32> -> vector<8x64xf32>
    %c0_3 = arith.constant 0 : index
    %c0_4 = arith.constant 0 : index
    %4 = vector.load %arg3[%c0_3, %c0_4] : memref<1x64xf32, #tpu.memory_space<vmem>>, vector<1x64xf32>
    %5 = vector.broadcast %4 : vector<1x64xf32> to vector<8x64xf32>
    %6 = arith.addf %3, %5 : vector<8x64xf32>
    %7 = math.tanh %6 : vector<8x64xf32>
    %8 = arith.truncf %7 : vector<8x64xf32> to vector<8x64xbf16>
    %c0_5 = arith.constant 0 : index
    %c0_6 = arith.constant 0 : index
    %9 = vector.load %arg4[%c0_5, %c0_6] : memref<64x64xbf16, #tpu.memory_space<vmem>>, vector<64x64xbf16>
    %cst_7 = arith.constant dense<0.000000e+00> : vector<8x64xf32>
    %10 = tpu.matmul %8, %9, %cst_7 {dimension_numbers = #tpu.dot_dimension_numbers<[1], [0], [0], [1], [0, 0, 1, 1], [], []>} : vector<8x64xbf16>, vector<64x64xbf16>, vector<8x64xf32> -> vector<8x64xf32>
    %c0_8 = arith.constant 0 : index
    %c0_9 = arith.constant 0 : index
    %11 = vector.load %arg5[%c0_8, %c0_9] : memref<1x64xf32, #tpu.memory_space<vmem>>, vector<1x64xf32>
    %12 = vector.broadcast %11 : vector<1x64xf32> to vector<8x64xf32>
    %13 = arith.addf %10, %12 : vector<8x64xf32>
    %14 = math.tanh %13 : vector<8x64xf32>
    %15 = arith.truncf %14 : vector<8x64xf32> to vector<8x64xbf16>
    %c0_10 = arith.constant 0 : index
    %c0_11 = arith.constant 0 : index
    %16 = vector.load %arg6[%c0_10, %c0_11] : memref<64x64xbf16, #tpu.memory_space<vmem>>, vector<64x64xbf16>
    %cst_12 = arith.constant dense<0.000000e+00> : vector<8x64xf32>
    %17 = tpu.matmul %15, %16, %cst_12 {dimension_numbers = #tpu.dot_dimension_numbers<[1], [0], [0], [1], [0, 0, 1, 1], [], []>} : vector<8x64xbf16>, vector<64x64xbf16>, vector<8x64xf32> -> vector<8x64xf32>
    %c0_13 = arith.constant 0 : index
    %c0_14 = arith.constant 0 : index
    %18 = vector.load %arg7[%c0_13, %c0_14] : memref<1x64xf32, #tpu.memory_space<vmem>>, vector<1x64xf32>
    %19 = vector.broadcast %18 : vector<1x64xf32> to vector<8x64xf32>
    %20 = arith.addf %17, %19 : vector<8x64xf32>
    %21 = math.tanh %20 : vector<8x64xf32>
    %22 = arith.truncf %21 : vector<8x64xf32> to vector<8x64xbf16>
    %c0_15 = arith.constant 0 : index
    %c0_16 = arith.constant 0 : index
    %23 = vector.load %arg8[%c0_15, %c0_16] : memref<64x128xbf16, #tpu.memory_space<vmem>>, vector<64x128xbf16>
    %cst_17 = arith.constant dense<0.000000e+00> : vector<8x128xf32>
    %24 = tpu.matmul %22, %23, %cst_17 {dimension_numbers = #tpu.dot_dimension_numbers<[1], [0], [0], [1], [0, 0, 1, 1], [], []>} : vector<8x64xbf16>, vector<64x128xbf16>, vector<8x128xf32> -> vector<8x128xf32>
    %c0_18 = arith.constant 0 : index
    %c0_19 = arith.constant 0 : index
    %25 = vector.load %arg9[%c0_18, %c0_19] : memref<1x128xf32, #tpu.memory_space<vmem>>, vector<1x128xf32>
    %26 = vector.broadcast %25 : vector<1x128xf32> to vector<8x128xf32>
    %27 = arith.addf %24, %26 : vector<8x128xf32>
    %c0_20 = arith.constant 0 : index
    %c0_21 = arith.constant 0 : index
    %28 = vector.load %arg10[%c0_20, %c0_21] : memref<8x128xf32, #tpu.memory_space<vmem>>, vector<8x128xf32>
    tpu.vector_store %arg10[%c0_20, %c0_21], %27 {strides = array<i32>} : memref<8x128xf32, #tpu.memory_space<vmem>>, vector<8x128xf32>,
    return
  }
  func.func @transform_0(%arg0: i32) -> (i32, i32) {
    %c0_i32 = arith.constant 0 : i32
    %c0_i32_0 = arith.constant 0 : i32
    return %arg0, %c0_i32 : i32, i32
  }
  func.func @transform_1(%arg0: i32) -> (i32, i32) {
    %c0_i32 = arith.constant 0 : i32
    %c0_i32_0 = arith.constant 0 : i32
    %c0_i32_1 = arith.constant 0 : i32
    return %c0_i32, %c0_i32_0 : i32, i32
  }
  func.func @transform_2(%arg0: i32) -> (i32, i32) {
    %c0_i32 = arith.constant 0 : i32
    %c0_i32_0 = arith.constant 0 : i32
    %c0_i32_1 = arith.constant 0 : i32
    return %c0_i32, %c0_i32_0 : i32, i32
  }
  func.func @transform_3(%arg0: i32) -> (i32, i32) {
    %c0_i32 = arith.constant 0 : i32
    %c0_i32_0 = arith.constant 0 : i32
    %c0_i32_1 = arith.constant 0 : i32
    return %c0_i32, %c0_i32_0 : i32, i32
  }
  func.func @transform_4(%arg0: i32) -> (i32, i32) {
    %c0_i32 = arith.constant 0 : i32
    %c0_i32_0 = arith.constant 0 : i32
    %c0_i32_1 = arith.constant 0 : i32
    return %c0_i32, %c0_i32_0 : i32, i32
  }
  func.func @transform_5(%arg0: i32) -> (i32, i32) {
    %c0_i32 = arith.constant 0 : i32
    %c0_i32_0 = arith.constant 0 : i32
    %c0_i32_1 = arith.constant 0 : i32
    return %c0_i32, %c0_i32_0 : i32, i32
  }
  func.func @transform_6(%arg0: i32) -> (i32, i32) {
    %c0_i32 = arith.constant 0 : i32
    %c0_i32_0 = arith.constant 0 : i32
    %c0_i32_1 = arith.constant 0 : i32
    return %c0_i32, %c0_i32_0 : i32, i32
  }
  func.func @transform_7(%arg0: i32) -> (i32, i32) {
    %c0_i32 = arith.constant 0 : i32
    %c0_i32_0 = arith.constant 0 : i32
    %c0_i32_1 = arith.constant 0 : i32
    return %c0_i32, %c0_i32_0 : i32, i32
  }
  func.func @transform_8(%arg0: i32) -> (i32, i32) {
    %c0_i32 = arith.constant 0 : i32
    %c0_i32_0 = arith.constant 0 : i32
    %c0_i32_1 = arith.constant 0 : i32
    return %c0_i32, %c0_i32_0 : i32, i32
  }
  func.func @transform_9(%arg0: i32) -> (i32, i32) {
    %c0_i32 = arith.constant 0 : i32
    %c0_i32_0 = arith.constant 0 : i32
    return %arg0, %c0_i32 : i32, i32
  }
}

</mosaic_0001>

<llo_original>
// kernel: tpu_custom_call.1
$region0: #{tpu_custom_call.1}
  #allocation0 [shape = 'u32[]', space=smem, size = 0x4, offset = 0x4, fixed_abs, tag = 'smem constant byte address 0x4 - core index']
  #allocation1 [shape = 'u32[144,128]{1,0:T(1,128)}', space=vmem, size = 0x12000, scoped, tag = 'internal scratch']
  %s0 = inlined_call_operand.vmem [shape: f32[8,4], index: 0, kind: input, shape index: {}]
  %s1 = inlined_call_operand.vmem [shape: bf16[4,64], index: 1, kind: input, shape index: {}]
  %s2 = inlined_call_operand.vmem [shape: f32[1,64], index: 2, kind: input, shape index: {}]
  %s3 = inlined_call_operand.hbm [shape: bf16[64,64], index: 3, kind: input, shape index: {}]
  %s4 = inlined_call_operand.vmem [shape: f32[1,64], index: 4, kind: input, shape index: {}]
  %s5 = inlined_call_operand.hbm [shape: bf16[64,64], index: 5, kind: input, shape index: {}]
  %s6 = inlined_call_operand.vmem [shape: f32[1,64], index: 6, kind: input, shape index: {}]
  %s7 = inlined_call_operand.hbm [shape: bf16[64,128], index: 7, kind: input, shape index: {}]
  %s8 = inlined_call_operand.vmem [shape: f32[1,128], index: 8, kind: input, shape index: {}]
  %s9 = inlined_call_operand.hbm [shape: f32[8,128], index: 9, kind: output, shape index: {}]
  %s10 = sld [smem:[#allocation0]]
  $region58: #{tpu_custom_call.1} parent=0
    _
  %s12 = ssub.s32 1, %s10
  %s13 = scalar_select 0, %s12, %s10
  $region1: #{tpu_custom_call.1} parent=0
    #allocation2 [shape = 'u8[16384]{0}', space=vmem, size = 0x4000, scoped, tag = 'input window, operand 3, single buffered']
    #allocation3 [shape = 's32[1]{0}', space=sflag, size = 0x4, scoped, tag = 'scoped memory for tpu_custom_call.1']
    #allocation4 [shape = 's32[1]{0}', space=sflag, size = 0x4, scoped, tag = 'scoped memory for tpu_custom_call.1']
    #allocation5 [shape = 'u8[16384]{0}', space=vmem, size = 0x4000, scoped, tag = 'input window, operand 5, single buffered']
    #allocation6 [shape = 's32[1]{0}', space=sflag, size = 0x4, scoped, tag = 'scoped memory for tpu_custom_call.1']
    #allocation7 [shape = 'u8[16384]{0}', space=vmem, size = 0x4000, scoped, tag = 'input window, operand 7, single buffered']
    #allocation8 [shape = 'u8[4096]{0}', space=vmem, size = 0x1000, scoped, tag = 'output window, operand 0, single buffered']
    %14 = vsyncpa [#allocation3], 0
    %15 = vsyncpa [#allocation6], 0
    %16 = vsyncpa [#allocation4], 0
    // Predicated region
    $region2: #{tpu_custom_call.1} parent=1 // pred_check
      _
    $region3: #{tpu_custom_call.1} parent=1 // pred_check_branch
      %18 = sbr.rel (0) target = $region5
    $region4: #{tpu_custom_call.1} parent=1 // pred_region
      _
    $region5: #{tpu_custom_call.1} parent=1 // pred_fallthru
      _
    // Predicated region
    $region6: #{tpu_custom_call.1} parent=1 // pred_check
      _
    $region7: #{tpu_custom_call.1} parent=1 // pred_check_branch
      %20 = sbr.rel (0) target = $region9
    $region8: #{tpu_custom_call.1} parent=1 // pred_region
      _
    $region9: #{tpu_custom_call.1} parent=1 // pred_fallthru
      _
    // Predicated region
    $region10: #{tpu_custom_call.1} parent=1 // pred_check
      _
    $region11: #{tpu_custom_call.1} parent=1 // pred_check_branch
      %22 = sbr.rel (0) target = $region13
    $region12: #{tpu_custom_call.1} parent=1 // pred_region
      _
    $region13: #{tpu_custom_call.1} parent=1 // pred_fallthru
      _
    // Predicated region
    $region14: #{tpu_custom_call.1} parent=1 // pred_check
      _
    $region15: #{tpu_custom_call.1} parent=1 // pred_check_branch
      %24 = sbr.rel (0) target = $region17
    $region16: #{tpu_custom_call.1} parent=1 // pred_region
      %s26 = ssub.s32 512, 512
      %27 = vsyncadd [#allocation3], %s26
      %s28 = sshll.u32 [#allocation2], 4
      %s29 = int_to_ptr.vmem [resolvable:$true] %s28
      %34 = dma.hbm_to_vmem [thread:$0]  %s3, 512, %s29, [#allocation3], 64, 64, 4
    $region17: #{tpu_custom_call.1} parent=1 // pred_fallthru
      _
    // Predicated region
    $region18: #{tpu_custom_call.1} parent=1 // pred_check
      _
    $region19: #{tpu_custom_call.1} parent=1 // pred_check_branch
      %36 = sbr.rel (0) target = $region21
    $region20: #{tpu_custom_call.1} parent=1 // pred_region
      _
    $region21: #{tpu_custom_call.1} parent=1 // pred_fallthru
      _
    // Predicated region
    $region22: #{tpu_custom_call.1} parent=1 // pred_check
      _
    $region23: #{tpu_custom_call.1} parent=1 // pred_check_branch
      %38 = sbr.rel (0) target = $region25
    $region24: #{tpu_custom_call.1} parent=1 // pred_region
      %s40 = ssub.s32 512, 512
      %41 = vsyncadd [#allocation6], %s40
      %s42 = sshll.u32 [#allocation5], 4
      %s43 = int_to_ptr.vmem [resolvable:$true] %s42
      %48 = dma.hbm_to_vmem [thread:$0]  %s5, 512, %s43, [#allocation6], 64, 64, 4
    $region25: #{tpu_custom_call.1} parent=1 // pred_fallthru
      _
    // Predicated region
    $region26: #{tpu_custom_call.1} parent=1 // pred_check
      _
    $region27: #{tpu_custom_call.1} parent=1 // pred_check_branch
      %50 = sbr.rel (0) target = $region29
    $region28: #{tpu_custom_call.1} parent=1 // pred_region
      _
    $region29: #{tpu_custom_call.1} parent=1 // pred_fallthru
      _
    // Predicated region
    $region30: #{tpu_custom_call.1} parent=1 // pred_check
      _
    $region31: #{tpu_custom_call.1} parent=1 // pred_check_branch
      %52 = sbr.rel (0) target = $region33
    $region32: #{tpu_custom_call.1} parent=1 // pred_region
      %s54 = ssub.s32 512, 512
      %55 = vsyncadd [#allocation6], %s54
      %s56 = sshll.u32 [#allocation7], 4
      %s57 = int_to_ptr.vmem [resolvable:$true] %s56
      %62 = dma.hbm_to_vmem [thread:$0]  %s7, 512, %s57, [#allocation6], 64, 64, 4
    $region33: #{tpu_custom_call.1} parent=1 // pred_fallthru
      _
    // Predicated region
    $region34: #{tpu_custom_call.1} parent=1 // pred_check
      _
    $region35: #{tpu_custom_call.1} parent=1 // pred_check_branch
      %64 = sbr.rel (0) target = $region37
    $region36: #{tpu_custom_call.1} parent=1 // pred_region
      _
    $region37: #{tpu_custom_call.1} parent=1 // pred_fallthru
      _
    // Predicated region
    $region38: #{tpu_custom_call.1} parent=1 // pred_check
      _
    $region39: #{tpu_custom_call.1} parent=1 // pred_check_branch
      %66 = sbr.rel (0) target = $region41
    $region40: #{tpu_custom_call.1} parent=1 // pred_region
      %67 = dma.done [#allocation3], 512
    $region41: #{tpu_custom_call.1} parent=1 // pred_fallthru
      _
    // Predicated region
    $region42: #{tpu_custom_call.1} parent=1 // pred_check
      _
    $region43: #{tpu_custom_call.1} parent=1 // pred_check_branch
      %69 = sbr.rel (0) target = $region45
    $region44: #{tpu_custom_call.1} parent=1 // pred_region
      %70 = dma.done [#allocation6], 512
    $region45: #{tpu_custom_call.1} parent=1 // pred_fallthru
      _
    // Predicated region
    $region46: #{tpu_custom_call.1} parent=1 // pred_check
      _
    $region47: #{tpu_custom_call.1} parent=1 // pred_check_branch
      %72 = sbr.rel (0) target = $region49
    $region48: #{tpu_custom_call.1} parent=1 // pred_region
      %73 = dma.done [#allocation6], 512
    $region49: #{tpu_custom_call.1} parent=1 // pred_fallthru
      _
    %v75 = vld [vmem:[%s0] sm:$0xff]
    %v76 = vpack.c.bf16 %v75, %v75
    %v77 = vld [vmem:[%s1] sm:$0x3]
    %v78 = vld [vmem:[%s2] sm:$0x1]
    %v80 = vlaneseq
    %v81 = vshrl.u32 %v80, 7
    %v82 = vsub.s32 0, %v81
    %v83 = vrot.slane %v78, %v82
    %vm85 = vcmask 31744
    %v87 = vsel %vm85, %v76, 0
    %vm89 = vcmask 1041408
    %v91 = vsel %vm89, %v77, 0
    %93 = vmatprep.subr.bf16.mxu0 0
    %94 = vmatpush1.bf16.msra.mxu0 0
    %95 = vmatprep.subr.bf16.mxu0 0
    %96 = vmatpush1.bf16.msra.mxu0 0
    %97 = vmatprep.subr.bf16.mxu0 0
    %98 = vmatpush1.bf16.msra.mxu0 0
    %99 = vmatprep.subr.bf16.mxu0 0
    %100 = vmatpush1.bf16.msra.mxu0 0
    %101 = vmatprep.subr.bf16.mxu0 0
    %102 = vmatpush1.bf16.msra.mxu0 0
    %103 = vmatprep.subr.bf16.mxu0 0
    %104 = vmatpush1.bf16.msra.mxu0 0
    %105 = vmatprep.subr.bf16.mxu0 0
    %106 = vmatpush1.bf16.msra.mxu0 0
    %107 = vmatprep.subr.bf16.mxu0 0
    %108 = vmatpush1.bf16.msra.mxu0 %v91
    %109 = vmatprep.subr.bf16.mxu0 0
    %110 = vmatpush2.bf16.msra.mxu0 0
    %111 = vmatprep.subr.bf16.mxu0 0
    %112 = vmatpush2.bf16.msra.mxu0 0
    %113 = vmatprep.subr.bf16.mxu0 0
    %114 = vmatpush2.bf16.msra.mxu0 0
    %115 = vmatprep.subr.bf16.mxu0 0
    %116 = vmatpush2.bf16.msra.mxu0 0
    %117 = vmatprep.subr.bf16.mxu0 0
    %118 = vmatpush2.bf16.msra.mxu0 0
    %119 = vmatprep.subr.bf16.mxu0 0
    %120 = vmatpush2.bf16.msra.mxu0 0
    %121 = vmatprep.subr.bf16.mxu0 0
    %122 = vmatpush2.bf16.msra.mxu0 0
    %123 = vmatprep.subr.bf16.mxu0 0
    %124 = vmatpush2.bf16.msra.mxu0 0
    %125 = vmatprep.mubr.bf16.mxu0 0
    %126 = vmatmul.mubr.bf16.gmra.mxu0 %v87
    %v127 = vpop.f32.mrf.mxu0
    %v128 = vadd.f32 %v83, %v127
    %v129 = vpop.f32.mrf.mxu0
    %v130 = vpop.f32.mrf.mxu0
    %v131 = vpop.f32.mrf.mxu0
    %132 = vdwg.mxu0
    %v133 = vtanh.pop %v128
    %v134 = vpack.c.bf16 %v133, %v133
    %v135 = vld [vmem:[#allocation2] sm:$0xf]
    %v136 = vld [vmem:[#allocation2 + $0x4] sm:$0xf]
    %v137 = vld [vmem:[#allocation2 + $0x8] sm:$0xf]
    %v138 = vld [vmem:[#allocation2 + $0xc] sm:$0xf]
    %v139 = vld [vmem:[#allocation2 + $0x10] sm:$0xf]
    %v140 = vld [vmem:[#allocation2 + $0x14] sm:$0xf]
    %v141 = vld [vmem:[#allocation2 + $0x18] sm:$0xf]
    %v142 = vld [vmem:[#allocation2 + $0x1c] sm:$0xf]
    %v143 = vld [vmem:[%s4] sm:$0x1]
    %v145 = vlaneseq
    %v146 = vshrl.u32 %v145, 7
    %v147 = vsub.s32 0, %v146
    %v148 = vrot.slane %v143, %v147
    %v158 = vunpack.c.l.b16 %v135
    %v159 = vunpack.c.l.b16 %v136
    %v160 = vunpack.c.l.b16 %v137
    %v161 = vunpack.c.l.b16 %v138
    %v162 = vunpack.c.l.b16 %v139
    %v163 = vunpack.c.l.b16 %v140
    %v164 = vunpack.c.l.b16 %v141
    %v165 = vunpack.c.l.b16 %v142
    %v166 = vpack.c.b16 %v159, %v158
    %v167 = vpack.c.b16 %v161, %v160
    %v168 = vpack.c.b16 %v163, %v162
    %v169 = vpack.c.b16 %v165, %v164
    %vm174 = vcmask 523264
    %v176 = vsel %vm174, %v134, 0
    %178 = vmatprep.subr.bf16.mxu0 0
    %179 = vmatpush1.bf16.msra.mxu0 0
    %180 = vmatprep.subr.bf16.mxu0 0
    %181 = vmatpush1.bf16.msra.mxu0 0
    %182 = vmatprep.subr.bf16.mxu0 0
    %183 = vmatpush1.bf16.msra.mxu0 0
    %184 = vmatprep.subr.bf16.mxu0 0
    %185 = vmatpush1.bf16.msra.mxu0 0
    %186 = vmatprep.subr.bf16.mxu0 0
    %187 = vmatpush1.bf16.msra.mxu0 %v169
    %188 = vmatprep.subr.bf16.mxu0 0
    %189 = vmatpush1.bf16.msra.mxu0 %v168
    %190 = vmatprep.subr.bf16.mxu0 0
    %191 = vmatpush1.bf16.msra.mxu0 %v167
    %192 = vmatprep.subr.bf16.mxu0 0
    %193 = vmatpush1.bf16.msra.mxu0 %v166
    %194 = vmatprep.subr.bf16.mxu0 0
    %195 = vmatpush2.bf16.msra.mxu0 0
    %196 = vmatprep.subr.bf16.mxu0 0
    %197 = vmatpush2.bf16.msra.mxu0 0
    %198 = vmatprep.subr.bf16.mxu0 0
    %199 = vmatpush2.bf16.msra.mxu0 0
    %200 = vmatprep.subr.bf16.mxu0 0
    %201 = vmatpush2.bf16.msra.mxu0 0
    %202 = vmatprep.subr.bf16.mxu0 0
    %203 = vmatpush2.bf16.msra.mxu0 0
    %204 = vmatprep.subr.bf16.mxu0 0
    %205 = vmatpush2.bf16.msra.mxu0 0
    %206 = vmatprep.subr.bf16.mxu0 0
    %207 = vmatpush2.bf16.msra.mxu0 0
    %208 = vmatprep.subr.bf16.mxu0 0
    %209 = vmatpush2.bf16.msra.mxu0 0
    %210 = vmatprep.mubr.bf16.mxu0 0
    %211 = vmatmul.mubr.bf16.gmra.mxu0 %v176
    %v212 = vpop.f32.mrf.mxu0
    %v213 = vadd.f32 %v148, %v212
    %v214 = vpop.f32.mrf.mxu0
    %v215 = vpop.f32.mrf.mxu0
    %v216 = vpop.f32.mrf.mxu0
    %217 = vdwg.mxu0
    %v218 = vtanh.pop %v213
    %v219 = vpack.c.bf16 %v218, %v218
    %v220 = vld [vmem:[#allocation5] sm:$0xf]
    %v221 = vld [vmem:[#allocation5 + $0x4] sm:$0xf]
    %v222 = vld [vmem:[#allocation5 + $0x8] sm:$0xf]
    %v223 = vld [vmem:[#allocation5 + $0xc] sm:$0xf]
    %v224 = vld [vmem:[#allocation5 + $0x10] sm:$0xf]
    %v225 = vld [vmem:[#allocation5 + $0x14] sm:$0xf]
    %v226 = vld [vmem:[#allocation5 + $0x18] sm:$0xf]
    %v227 = vld [vmem:[#allocation5 + $0x1c] sm:$0xf]
    %v228 = vld [vmem:[%s6] sm:$0x1]
    %v230 = vlaneseq
    %v231 = vshrl.u32 %v230, 7
    %v232 = vsub.s32 0, %v231
    %v233 = vrot.slane %v228, %v232
    %v243 = vunpack.c.l.b16 %v220
    %v244 = vunpack.c.l.b16 %v221
    %v245 = vunpack.c.l.b16 %v222
    %v246 = vunpack.c.l.b16 %v223
    %v247 = vunpack.c.l.b16 %v224
    %v248 = vunpack.c.l.b16 %v225
    %v249 = vunpack.c.l.b16 %v226
    %v250 = vunpack.c.l.b16 %v227
    %v251 = vpack.c.b16 %v244, %v243
    %v252 = vpack.c.b16 %v246, %v245
    %v253 = vpack.c.b16 %v248, %v247
    %v254 = vpack.c.b16 %v250, %v249
    %v260 = vsel %vm174, %v219, 0
    %262 = vmatprep.subr.bf16.mxu0 0
    %263 = vmatpush1.bf16.msra.mxu0 0
    %264 = vmatprep.subr.bf16.mxu0 0
    %265 = vmatpush1.bf16.msra.mxu0 0
    %266 = vmatprep.subr.bf16.mxu0 0
    %267 = vmatpush1.bf16.msra.mxu0 0
    %268 = vmatprep.subr.bf16.mxu0 0
    %269 = vmatpush1.bf16.msra.mxu0 0
    %270 = vmatprep.subr.bf16.mxu0 0
    %271 = vmatpush1.bf16.msra.mxu0 %v254
    %272 = vmatprep.subr.bf16.mxu0 0
    %273 = vmatpush1.bf16.msra.mxu0 %v253
    %274 = vmatprep.subr.bf16.mxu0 0
    %275 = vmatpush1.bf16.msra.mxu0 %v252
    %276 = vmatprep.subr.bf16.mxu0 0
    %277 = vmatpush1.bf16.msra.mxu0 %v251
    %278 = vmatprep.subr.bf16.mxu0 0
    %279 = vmatpush2.bf16.msra.mxu0 0
    %280 = vmatprep.subr.bf16.mxu0 0
    %281 = vmatpush2.bf16.msra.mxu0 0
    %282 = vmatprep.subr.bf16.mxu0 0
    %283 = vmatpush2.bf16.msra.mxu0 0
    %284 = vmatprep.subr.bf16.mxu0 0
    %285 = vmatpush2.bf16.msra.mxu0 0
    %286 = vmatprep.subr.bf16.mxu0 0
    %287 = vmatpush2.bf16.msra.mxu0 0
    %288 = vmatprep.subr.bf16.mxu0 0
    %289 = vmatpush2.bf16.msra.mxu0 0
    %290 = vmatprep.subr.bf16.mxu0 0
    %291 = vmatpush2.bf16.msra.mxu0 0
    %292 = vmatprep.subr.bf16.mxu0 0
    %293 = vmatpush2.bf16.msra.mxu0 0
    %294 = vmatprep.mubr.bf16.mxu0 0
    %295 = vmatmul.mubr.bf16.gmra.mxu0 %v260
    %v296 = vpop.f32.mrf.mxu0
    %v297 = vadd.f32 %v233, %v296
    %v298 = vpop.f32.mrf.mxu0
    %v299 = vpop.f32.mrf.mxu0
    %v300 = vpop.f32.mrf.mxu0
    %301 = vdwg.mxu0
    %v302 = vtanh.pop %v297
    %v303 = vpack.c.bf16 %v302, %v302
    %v304 = vld [vmem:[#allocation7] sm:$0xf]
    %v305 = vld [vmem:[#allocation7 + $0x4] sm:$0xf]
    %v306 = vld [vmem:[#allocation7 + $0x8] sm:$0xf]
    %v307 = vld [vmem:[#allocation7 + $0xc] sm:$0xf]
    %v308 = vld [vmem:[#allocation7 + $0x10] sm:$0xf]
    %v309 = vld [vmem:[#allocation7 + $0x14] sm:$0xf]
    %v310 = vld [vmem:[#allocation7 + $0x18] sm:$0xf]
    %v311 = vld [vmem:[#allocation7 + $0x1c] sm:$0xf]
    %v312 = vld [vmem:[%s8] sm:$0x1]
    %v314 = vlaneseq
    %v315 = vshrl.u32 %v314, 7
    %v316 = vsub.s32 0, %v315
    %v317 = vrot.slane %v312, %v316
    %v327 = vunpack.c.l.b16 %v304
    %v328 = vunpack.c.l.b16 %v305
    %v329 = vunpack.c.l.b16 %v306
    %v330 = vunpack.c.l.b16 %v307
    %v331 = vunpack.c.l.b16 %v308
    %v332 = vunpack.c.l.b16 %v309
    %v333 = vunpack.c.l.b16 %v310
    %v334 = vunpack.c.l.b16 %v311
    %v335 = vpack.c.b16 %v328, %v327
    %v336 = vpack.c.b16 %v330, %v329
    %v337 = vpack.c.b16 %v332, %v331
    %v338 = vpack.c.b16 %v334, %v333
    %v344 = vsel %vm174, %v303, 0
    %346 = vmatprep.subr.bf16.mxu0 0
    %347 = vmatpush1.bf16.msra.mxu0 0
    %348 = vmatprep.subr.bf16.mxu0 0
    %349 = vmatpush1.bf16.msra.mxu0 0
    %350 = vmatprep.subr.bf16.mxu0 0
    %351 = vmatpush1.bf16.msra.mxu0 0
    %352 = vmatprep.subr.bf16.mxu0 0
    %353 = vmatpush1.bf16.msra.mxu0 0
    %354 = vmatprep.subr.bf16.mxu0 0
    %355 = vmatpush1.bf16.msra.mxu0 %v338
    %356 = vmatprep.subr.bf16.mxu0 0
    %357 = vmatpush1.bf16.msra.mxu0 %v337
    %358 = vmatprep.subr.bf16.mxu0 0
    %359 = vmatpush1.bf16.msra.mxu0 %v336
    %360 = vmatprep.subr.bf16.mxu0 0
    %361 = vmatpush1.bf16.msra.mxu0 %v335
    %362 = vmatprep.subr.bf16.mxu0 0
    %363 = vmatpush2.bf16.msra.mxu0 0
    %364 = vmatprep.subr.bf16.mxu0 0
    %365 = vmatpush2.bf16.msra.mxu0 0
    %366 = vmatprep.subr.bf16.mxu0 0
    %367 = vmatpush2.bf16.msra.mxu0 0
    %368 = vmatprep.subr.bf16.mxu0 0
    %369 = vmatpush2.bf16.msra.mxu0 0
    %370 = vmatprep.subr.bf16.mxu0 0
    %371 = vmatpush2.bf16.msra.mxu0 0
    %372 = vmatprep.subr.bf16.mxu0 0
    %373 = vmatpush2.bf16.msra.mxu0 0
    %374 = vmatprep.subr.bf16.mxu0 0
    %375 = vmatpush2.bf16.msra.mxu0 0
    %376 = vmatprep.subr.bf16.mxu0 0
    %377 = vmatpush2.bf16.msra.mxu0 0
    %378 = vmatprep.mubr.bf16.mxu0 0
    %379 = vmatmul.mubr.bf16.gmra.mxu0 %v344
    %v380 = vpop.f32.mrf.mxu0
    %v381 = vadd.f32 %v317, %v380
    %v382 = vpop.f32.mrf.mxu0
    %v383 = vpop.f32.mrf.mxu0
    %v384 = vpop.f32.mrf.mxu0
    %385 = vdwg.mxu0
    %386 = vst [vmem:[#allocation8] sm:$0xff] %v381
    // Predicated region
    $region50: #{tpu_custom_call.1} parent=1 // pred_check
      _
    $region51: #{tpu_custom_call.1} parent=1 // pred_check_branch
      %388 = sbr.rel (0) target = $region53
    $region52: #{tpu_custom_call.1} parent=1 // pred_region
      %s390 = ssub.s32 128, 128
      %391 = vsyncadd [#allocation4], %s390
      %s393 = sshll.u32 [#allocation8], 4
      %s394 = int_to_ptr.vmem [resolvable:$true] %s393
      %396 = dma.vmem_to_hbm [thread:$0]  %s394, 128, %s9, [#allocation4]
    $region53: #{tpu_custom_call.1} parent=1 // pred_fallthru
      _
    // Predicated region
    $region54: #{tpu_custom_call.1} parent=1 // pred_check
      _
    $region55: #{tpu_custom_call.1} parent=1 // pred_check_branch
      %398 = sbr.rel (0) target = $region57
    $region56: #{tpu_custom_call.1} parent=1 // pred_region
      %399 = dma.done [#allocation4], 128
    $region57: #{tpu_custom_call.1} parent=1 // pred_fallthru
      _
    %400 = vsyncpa [#allocation3], 1
    %401 = vsyncpa [#allocation6], 1
    %402 = vsyncpa [#allocation4], 1

</llo_original>
